<compile_context>
chip_gen: v6e
topology: v6e:2x2x1
jax: 0.10.0
libtpu: 0.0.40
codegen_flags: <defaults>
</compile_context>

<pallas_src>
import jax
import jax.numpy as jnp
from jax.experimental import pallas as pl
from jax.experimental.pallas import tpu as pltpu

# --- module constants (from adc_learning.py) ---
DENSE_L = 20          # dense_sampling_L
NUM_ADC_P = 4         # num_of_adc_p
L_TILDE = 4           # num_samples_L_tilde
GAUSS_STD = 0.4       # gaussian_sampling_std

IN_DIM = NUM_ADC_P * DENSE_L      # 80
OUT_DIM = NUM_ADC_P * L_TILDE     # 16

_LANES = 128                      # VMEM lane width (last dim padded to this)
_VMEM_BUDGET = 28 << 20           # per-call scratch budget, safe on v5e/v6e/v7x


def sampling_kernel(x_ref, s_ref, o_ref):
    """One batch tile of the SamplingLayer forward.

    x_ref : [TB, 80]  VMEM (f32)  input tile (double-buffered by Pallas)
    s_ref : [80, 16]  VMEM (f32)  block-diagonal Gaussian window matrix (resident)
    o_ref : [TB, 16]  VMEM        output tile
    """
    y = jnp.dot(x_ref[...], s_ref[...], preferred_element_type=jnp.float32)
    o_ref[...] = y.astype(o_ref.dtype)


def build_sampling_matrix(weight):
    """Fold the Gaussian windows into a [80, 16] block-diagonal matrix.

    S[v*20 + l, v*4 + k] = exp(-(t_l - weight[k])^2 / std^2), t_l = 1..20.
    Exact: the layer is linear in x for a fixed weight parameter.
    """
    t = jnp.arange(1, DENSE_L + 1, dtype=jnp.float32)                    # [20]
    w = weight.astype(jnp.float32)                                       # [4]
    g = jnp.exp(-((t[:, None] - w[None, :]) ** 2) / (GAUSS_STD ** 2))    # [20, 4]
    # one copy of g per ADC chain on the block diagonal -> [80, 16]
    return jnp.kron(jnp.eye(NUM_ADC_P, dtype=jnp.float32), g)


def _round_up(n, m):
    return ((n + m - 1) // m) * m


def _pick_tile(b_rows, block_b, x_itemsize, out_itemsize, split_rows):
    """Batch tile: multiple of 8, VMEM-budgeted, >=2 grid steps for big batches."""
    # double-buffered VMEM bytes/row; both 80 and 16 lane-pad to 128 in VMEM
    per_row = 2 * _LANES * (x_itemsize + out_itemsize)
    tb_cap = max(8, (_VMEM_BUDGET // per_row) // 8 * 8)
    tb = min(block_b, b_rows, tb_cap)
    if b_rows >= split_rows:
        # v7x megacore: keep >= 2 grid steps so ("parallel",) splits the batch
        # across both TensorCores (harmless extra step on v5e/v6e).
        tb = min(tb, _round_up(pl.cdiv(b_rows, 2), 8))
    return max(8, (tb // 8) * 8)


def sampling_forward(x, weight, *, block_b=8192, out_dtype=jnp.float32,
                     split_rows=4096):
    """SamplingLayer forward: x [B, 80] -> [B, 16]."""
    B, d = x.shape
    assert d == IN_DIM, f"expected {IN_DIM} input features, got {d}"

    # Pad at most to a multiple of 8 sublanes (only copies when B % 8 != 0).
    b_rows = _round_up(B, 8)
    if b_rows != B:
        x = jnp.pad(x, ((0, b_rows - B), (0, 0)))

    x_itemsize = jnp.dtype(x.dtype).itemsize
    out_itemsize = jnp.dtype(out_dtype).itemsize
    tb = _pick_tile(b_rows, block_b, x_itemsize, out_itemsize, split_rows)
    grid = (pl.cdiv(b_rows, tb),)   # ragged last step handled by Pallas masking

    s = build_sampling_matrix(weight)   # [80, 16] f32, ~5 KB, resident in VMEM

    # Explicit scoped-VMEM limit derived from the actual (lane-padded,
    # double-buffered) footprint, with headroom; never below common defaults,
    # never above v7x's 64 MiB physical VMEM.
    vmem_need = tb * 2 * _LANES * (x_itemsize + out_itemsize) + 2 * _LANES * _LANES * 4
    vmem_limit = int(min(max(vmem_need + (4 << 20), 16 << 20), 48 << 20))

    cost = pl.CostEstimate(
        flops=2 * b_rows * IN_DIM * OUT_DIM,
        transcendentals=0,
        bytes_accessed=(b_rows * IN_DIM * x_itemsize
                        + b_rows * OUT_DIM * out_itemsize
                        + IN_DIM * OUT_DIM * 4),
    )

    out = pl.pallas_call(
        sampling_kernel,
        out_shape=jax.ShapeDtypeStruct((b_rows, OUT_DIM), out_dtype),
        grid_spec=pltpu.PrefetchScalarGridSpec(
            num_scalar_prefetch=0,
            grid=grid,
            in_specs=[
                pl.BlockSpec((tb, IN_DIM), lambda i: (i, 0)),       # x tile, pipelined
                pl.BlockSpec((IN_DIM, OUT_DIM), lambda i: (0, 0)),  # S stays resident
            ],
            out_specs=pl.BlockSpec((tb, OUT_DIM), lambda i: (i, 0)),
        ),
        compiler_params=pltpu.CompilerParams(
            dimension_semantics=("parallel",),     # v7x: shard batch tiles over both TCs
            vmem_limit_bytes=vmem_limit),
        cost_estimate=cost,
    )(x, s)

    return out if b_rows == B else out[:B]


def sampling_reference(x, weight):
    """Direct port of the PyTorch double loop (float32)."""
    t = jnp.arange(1, DENSE_L + 1, dtype=jnp.float32)
    out = jnp.zeros((x.shape[0], OUT_DIM), dtype=jnp.float32)
    for v, j in enumerate(range(0, DENSE_L * NUM_ADC_P, DENSE_L)):
        for k in range(L_TILDE):
            win = jnp.exp(-((t - weight[k]) ** 2) / (GAUSS_STD ** 2))
            out = out.at[:, v * L_TILDE + k].set(
                jnp.sum(x[:, j:j + DENSE_L] * win, axis=1))
    return out


if __name__ == "__main__":
    key = jax.random.PRNGKey(0)

    # Parameter init from the PyTorch module: arange(4, 20, 4) = [4, 8, 12, 16].
    weight = jnp.arange(L_TILDE, DENSE_L, L_TILDE, dtype=jnp.float32)

    # Case 1: B divisible by 8 -> single grid step, zero padding / extra copies.
    B = 512
    x = jax.random.normal(key, (B, IN_DIM), dtype=jnp.float32)
    out = jax.block_until_ready(sampling_forward(x, weight))
    ref = jax.block_until_ready(sampling_reference(x, weight))
    assert out.shape == (B, OUT_DIM) and out.dtype == jnp.float32
    assert jnp.allclose(out, ref, rtol=1e-4, atol=1e-4), "mismatch vs reference (B=512)"

    # Case 2: B not a multiple of 8 -> tiny (<=7 row) pad + slice-back path.
    B2 = 137
    x2 = jax.random.normal(jax.random.PRNGKey(1), (B2, IN_DIM), dtype=jnp.float32)
    out2 = jax.block_until_ready(sampling_forward(x2, weight))
    ref2 = jax.block_until_ready(sampling_reference(x2, weight))
    assert out2.shape == (B2, OUT_DIM)
    assert jnp.allclose(out2, ref2, rtol=1e-4, atol=1e-4), "mismatch vs reference (B=137)"

    print("KERNEL_OK")
</pallas_src>

<mosaic_0001>
module attributes {stable_mosaic.version = 11 : i64} {
  func.func @sampling_kernel(%arg0: i32, %arg1: memref<512x80xf32, #tpu.memory_space<vmem>>, %arg2: memref<80x16xf32, #tpu.memory_space<vmem>>, %arg3: memref<512x16xf32, #tpu.memory_space<vmem>>) attributes {dimension_semantics = [#tpu.dimension_semantics<parallel>], iteration_bounds = array<i64: 1>, scalar_prefetch = 0 : i64, scratch_operands = 0 : i64, tpu.core_type = #tpu.core_type<tc>, window_params = [{transform_indices = @transform_0, window_bounds = array<i64: 512, 80>}, {pipeline_mode = #tpu.pipeline_mode<synchronous>, transform_indices = @transform_1, window_bounds = array<i64: 80, 16>}, {transform_indices = @transform_2, window_bounds = array<i64: 512, 16>}]} {
    %c0 = arith.constant 0 : index
    %c0_0 = arith.constant 0 : index
    %0 = vector.load %arg1[%c0, %c0_0] : memref<512x80xf32, #tpu.memory_space<vmem>>, vector<512x80xf32>
    %c0_1 = arith.constant 0 : index
    %c0_2 = arith.constant 0 : index
    %1 = vector.load %arg2[%c0_1, %c0_2] : memref<80x16xf32, #tpu.memory_space<vmem>>, vector<80x16xf32>
    %cst = arith.constant dense<0.000000e+00> : vector<512x16xf32>
    %2 = tpu.matmul %0, %1, %cst {dimension_numbers = #tpu.dot_dimension_numbers<[1], [0], [0], [1], [0, 0, 1, 1], [], []>} : vector<512x80xf32>, vector<80x16xf32>, vector<512x16xf32> -> vector<512x16xf32>
    %c0_3 = arith.constant 0 : index
    %c0_4 = arith.constant 0 : index
    %3 = vector.load %arg3[%c0_3, %c0_4] : memref<512x16xf32, #tpu.memory_space<vmem>>, vector<512x16xf32>
    tpu.vector_store %arg3[%c0_3, %c0_4], %2 {strides = array<i32>} : memref<512x16xf32, #tpu.memory_space<vmem>>, vector<512x16xf32>,
    return
  }
  func.func @transform_0(%arg0: i32) -> (i32, i32) {
    %c0_i32 = arith.constant 0 : i32
    %c0_i32_0 = arith.constant 0 : i32
    return %arg0, %c0_i32 : i32, i32
  }
  func.func @transform_1(%arg0: i32) -> (i32, i32) {
    %c0_i32 = arith.constant 0 : i32
    %c0_i32_0 = arith.constant 0 : i32
    %c0_i32_1 = arith.constant 0 : i32
    return %c0_i32, %c0_i32_0 : i32, i32
  }
  func.func @transform_2(%arg0: i32) -> (i32, i32) {
    %c0_i32 = arith.constant 0 : i32
    %c0_i32_0 = arith.constant 0 : i32
    return %arg0, %c0_i32 : i32, i32
  }
}

</mosaic_0001>

<llo_original>
// kernel: tpu_custom_call.1
$region0: #{tpu_custom_call.1}
  #allocation0 [shape = 'u32[]', space=smem, size = 0x4, offset = 0x4, fixed_abs, tag = 'smem constant byte address 0x4 - core index']
  #allocation1 [shape = 'u32[144,128]{1,0:T(1,128)}', space=vmem, size = 0x12000, scoped, tag = 'internal scratch']
  %s0 = inlined_call_operand.vmem [shape: f32[512,80], index: 0, kind: input, shape index: {}]
  %s1 = inlined_call_operand.vmem [shape: f32[80,16], index: 1, kind: input, shape index: {}]
  %s2 = inlined_call_operand.vmem [shape: f32[512,16], index: 2, kind: output, shape index: {}]
  %s3 = sld [smem:[#allocation0]]
  $region18: #{tpu_custom_call.1} parent=0
    _
  %s5 = ssub.s32 1, %s3
  %s6 = scalar_select 0, %s5, %s3
  // Predicated region
  $region2: #{tpu_custom_call.1} parent=0 // pred_check
    _
  $region3: #{tpu_custom_call.1} parent=0 // pred_check_branch
    %8 = sbr.rel (0) target = $region5
  $region4: #{tpu_custom_call.1} parent=0 // pred_region
    _
  $region5: #{tpu_custom_call.1} parent=0 // pred_fallthru
    _
  // Predicated region
  $region6: #{tpu_custom_call.1} parent=0 // pred_check
    _
  $region7: #{tpu_custom_call.1} parent=0 // pred_check_branch
    %10 = sbr.rel (0) target = $region9
  $region8: #{tpu_custom_call.1} parent=0 // pred_region
    _
  $region9: #{tpu_custom_call.1} parent=0 // pred_fallthru
    _
  %v11 = vld [vmem:[%s0] sm:$0xff]
  %v12 = vld [vmem:[%s0 + $0x8] sm:$0xff]
  %v13 = vld [vmem:[%s0 + $0x10] sm:$0xff]
  %v14 = vld [vmem:[%s0 + $0x18] sm:$0xff]
  %v15 = vld [vmem:[%s0 + $0x20] sm:$0xff]
  %v16 = vld [vmem:[%s0 + $0x28] sm:$0xff]
  %v17 = vld [vmem:[%s0 + $0x30] sm:$0xff]
  %v18 = vld [vmem:[%s0 + $0x38] sm:$0xff]
  %v19 = vld [vmem:[%s0 + $0x40] sm:$0xff]
  %v20 = vld [vmem:[%s0 + $0x48] sm:$0xff]
  %v21 = vld [vmem:[%s0 + $0x50] sm:$0xff]
  %v22 = vld [vmem:[%s0 + $0x58] sm:$0xff]
  %v23 = vld [vmem:[%s0 + $0x60] sm:$0xff]
  %v24 = vld [vmem:[%s0 + $0x68] sm:$0xff]
  %v25 = vld [vmem:[%s0 + $0x70] sm:$0xff]
  %v26 = vld [vmem:[%s0 + $0x78] sm:$0xff]
  %v27 = vld [vmem:[%s0 + $0x80] sm:$0xff]
  %v28 = vld [vmem:[%s0 + $0x88] sm:$0xff]
  %v29 = vld [vmem:[%s0 + $0x90] sm:$0xff]
  %v30 = vld [vmem:[%s0 + $0x98] sm:$0xff]
  %v31 = vld [vmem:[%s0 + $0xa0] sm:$0xff]
  %v32 = vld [vmem:[%s0 + $0xa8] sm:$0xff]
  %v33 = vld [vmem:[%s0 + $0xb0] sm:$0xff]
  %v34 = vld [vmem:[%s0 + $0xb8] sm:$0xff]
  %v35 = vld [vmem:[%s0 + $0xc0] sm:$0xff]
  %v36 = vld [vmem:[%s0 + $0xc8] sm:$0xff]
  %v37 = vld [vmem:[%s0 + $0xd0] sm:$0xff]
  %v38 = vld [vmem:[%s0 + $0xd8] sm:$0xff]
  %v39 = vld [vmem:[%s0 + $0xe0] sm:$0xff]
  %v40 = vld [vmem:[%s0 + $0xe8] sm:$0xff]
  %v41 = vld [vmem:[%s0 + $0xf0] sm:$0xff]
  %v42 = vld [vmem:[%s0 + $0xf8] sm:$0xff]
  %v43 = vld [vmem:[%s0 + $0x100] sm:$0xff]
  %v44 = vld [vmem:[%s0 + $0x108] sm:$0xff]
  %v45 = vld [vmem:[%s0 + $0x110] sm:$0xff]
  %v46 = vld [vmem:[%s0 + $0x118] sm:$0xff]
  %v47 = vld [vmem:[%s0 + $0x120] sm:$0xff]
  %v48 = vld [vmem:[%s0 + $0x128] sm:$0xff]
  %v49 = vld [vmem:[%s0 + $0x130] sm:$0xff]
  %v50 = vld [vmem:[%s0 + $0x138] sm:$0xff]
  %v51 = vld [vmem:[%s0 + $0x140] sm:$0xff]
  %v52 = vld [vmem:[%s0 + $0x148] sm:$0xff]
  %v53 = vld [vmem:[%s0 + $0x150] sm:$0xff]
  %v54 = vld [vmem:[%s0 + $0x158] sm:$0xff]
  %v55 = vld [vmem:[%s0 + $0x160] sm:$0xff]
  %v56 = vld [vmem:[%s0 + $0x168] sm:$0xff]
  %v57 = vld [vmem:[%s0 + $0x170] sm:$0xff]
  %v58 = vld [vmem:[%s0 + $0x178] sm:$0xff]
  %v59 = vld [vmem:[%s0 + $0x180] sm:$0xff]
  %v60 = vld [vmem:[%s0 + $0x188] sm:$0xff]
  %v61 = vld [vmem:[%s0 + $0x190] sm:$0xff]
  %v62 = vld [vmem:[%s0 + $0x198] sm:$0xff]
  %v63 = vld [vmem:[%s0 + $0x1a0] sm:$0xff]
  %v64 = vld [vmem:[%s0 + $0x1a8] sm:$0xff]
  %v65 = vld [vmem:[%s0 + $0x1b0] sm:$0xff]
  %v66 = vld [vmem:[%s0 + $0x1b8] sm:$0xff]
  %v67 = vld [vmem:[%s0 + $0x1c0] sm:$0xff]
  %v68 = vld [vmem:[%s0 + $0x1c8] sm:$0xff]
  %v69 = vld [vmem:[%s0 + $0x1d0] sm:$0xff]
  %v70 = vld [vmem:[%s0 + $0x1d8] sm:$0xff]
  %v71 = vld [vmem:[%s0 + $0x1e0] sm:$0xff]
  %v72 = vld [vmem:[%s0 + $0x1e8] sm:$0xff]
  %v73 = vld [vmem:[%s0 + $0x1f0] sm:$0xff]
  %v74 = vld [vmem:[%s0 + $0x1f8] sm:$0xff]
  %v75 = vld [vmem:[%s1] sm:$0xff]
  %v76 = vld [vmem:[%s1 + $0x8] sm:$0xff]
  %v77 = vld [vmem:[%s1 + $0x10] sm:$0xff]
  %v78 = vld [vmem:[%s1 + $0x18] sm:$0xff]
  %v79 = vld [vmem:[%s1 + $0x20] sm:$0xff]
  %v80 = vld [vmem:[%s1 + $0x28] sm:$0xff]
  %v81 = vld [vmem:[%s1 + $0x30] sm:$0xff]
  %v82 = vld [vmem:[%s1 + $0x38] sm:$0xff]
  %v83 = vld [vmem:[%s1 + $0x40] sm:$0xff]
  %v84 = vld [vmem:[%s1 + $0x48] sm:$0xff]
  %vm85 = vcmask 654336
  %v87 = vsel %vm85, %v11, 0
  %v90 = vsel %vm85, %v12, 0
  %v93 = vsel %vm85, %v13, 0
  %v96 = vsel %vm85, %v14, 0
  %v99 = vsel %vm85, %v15, 0
  %v102 = vsel %vm85, %v16, 0
  %v105 = vsel %vm85, %v17, 0
  %v108 = vsel %vm85, %v18, 0
  %v111 = vsel %vm85, %v19, 0
  %v114 = vsel %vm85, %v20, 0
  %v117 = vsel %vm85, %v21, 0
  %v120 = vsel %vm85, %v22, 0
  %v123 = vsel %vm85, %v23, 0
  %v126 = vsel %vm85, %v24, 0
  %v129 = vsel %vm85, %v25, 0
  %v132 = vsel %vm85, %v26, 0
  %v135 = vsel %vm85, %v27, 0
  %v138 = vsel %vm85, %v28, 0
  %v141 = vsel %vm85, %v29, 0
  %v144 = vsel %vm85, %v30, 0
  %v147 = vsel %vm85, %v31, 0
  %v150 = vsel %vm85, %v32, 0
  %v153 = vsel %vm85, %v33, 0
  %v156 = vsel %vm85, %v34, 0
  %v159 = vsel %vm85, %v35, 0
  %v162 = vsel %vm85, %v36, 0
  %v165 = vsel %vm85, %v37, 0
  %v168 = vsel %vm85, %v38, 0
  %v171 = vsel %vm85, %v39, 0
  %v174 = vsel %vm85, %v40, 0
  %v177 = vsel %vm85, %v41, 0
  %v180 = vsel %vm85, %v42, 0
  %v183 = vsel %vm85, %v43, 0
  %v186 = vsel %vm85, %v44, 0
  %v189 = vsel %vm85, %v45, 0
  %v192 = vsel %vm85, %v46, 0
  %v195 = vsel %vm85, %v47, 0
  %v198 = vsel %vm85, %v48, 0
  %v201 = vsel %vm85, %v49, 0
  %v204 = vsel %vm85, %v50, 0
  %v207 = vsel %vm85, %v51, 0
  %v210 = vsel %vm85, %v52, 0
  %v213 = vsel %vm85, %v53, 0
  %v216 = vsel %vm85, %v54, 0
  %v219 = vsel %vm85, %v55, 0
  %v222 = vsel %vm85, %v56, 0
  %v225 = vsel %vm85, %v57, 0
  %v228 = vsel %vm85, %v58, 0
  %v231 = vsel %vm85, %v59, 0
  %v234 = vsel %vm85, %v60, 0
  %v237 = vsel %vm85, %v61, 0
  %v240 = vsel %vm85, %v62, 0
  %v243 = vsel %vm85, %v63, 0
  %v246 = vsel %vm85, %v64, 0
  %v249 = vsel %vm85, %v65, 0
  %v252 = vsel %vm85, %v66, 0
  %v255 = vsel %vm85, %v67, 0
  %v258 = vsel %vm85, %v68, 0
  %v261 = vsel %vm85, %v69, 0
  %v264 = vsel %vm85, %v70, 0
  %v267 = vsel %vm85, %v71, 0
  %v270 = vsel %vm85, %v72, 0
  %v273 = vsel %vm85, %v73, 0
  %v276 = vsel %vm85, %v74, 0
  %278 = vmatprep.subr.mxu0 0.0
  %279 = vmatpush1.msra.mxu0 0.0
  %280 = vmatprep.subr.mxu0 0.0
  %281 = vmatpush1.msra.mxu0 0.0
  %282 = vmatprep.subr.mxu0 0.0
  %283 = vmatpush1.msra.mxu0 0.0
  %284 = vmatprep.subr.mxu0 0.0
  %285 = vmatpush1.msra.mxu0 0.0
  %286 = vmatprep.subr.mxu0 0.0
  %287 = vmatpush1.msra.mxu0 0.0
  %288 = vmatprep.subr.mxu0 0.0
  %289 = vmatpush1.msra.mxu0 0.0
  %290 = vmatprep.subr.mxu0 0.0
  %291 = vmatpush1.msra.mxu0 %v84
  %292 = vmatprep.subr.mxu0 0.0
  %293 = vmatpush1.msra.mxu0 %v83
  %294 = vmatprep.subr.mxu0 0.0
  %295 = vmatpush1.msra.mxu0 %v82
  %296 = vmatprep.subr.mxu0 0.0
  %297 = vmatpush1.msra.mxu0 %v81
  %298 = vmatprep.subr.mxu0 0.0
  %299 = vmatpush1.msra.mxu0 %v80
  %300 = vmatprep.subr.mxu0 0.0
  %301 = vmatpush1.msra.mxu0 %v79
  %302 = vmatprep.subr.mxu0 0.0
  %303 = vmatpush1.msra.mxu0 %v78
  %304 = vmatprep.subr.mxu0 0.0
  %305 = vmatpush1.msra.mxu0 %v77
  %306 = vmatprep.subr.mxu0 0.0
  %307 = vmatpush1.msra.mxu0 %v76
  %308 = vmatprep.subr.mxu0 0.0
  %309 = vmatpush1.msra.mxu0 %v75
  %310 = vmatprep.subr.mxu0 0.0
  %311 = vmatpush2.msra.mxu0 0.0
  %312 = vmatprep.subr.mxu0 0.0
  %313 = vmatpush2.msra.mxu0 0.0
  %314 = vmatprep.subr.mxu0 0.0
  %315 = vmatpush2.msra.mxu0 0.0
  %316 = vmatprep.subr.mxu0 0.0
  %317 = vmatpush2.msra.mxu0 0.0
  %318 = vmatprep.subr.mxu0 0.0
  %319 = vmatpush2.msra.mxu0 0.0
  %320 = vmatprep.subr.mxu0 0.0
  %321 = vmatpush2.msra.mxu0 0.0
  %322 = vmatprep.subr.mxu0 0.0
  %323 = vmatpush2.msra.mxu0 0.0
  %324 = vmatprep.subr.mxu0 0.0
  %325 = vmatpush2.msra.mxu0 0.0
  %326 = vmatprep.subr.mxu0 0.0
  %327 = vmatpush2.msra.mxu0 0.0
  %328 = vmatprep.subr.mxu0 0.0
  %329 = vmatpush2.msra.mxu0 0.0
  %330 = vmatprep.subr.mxu0 0.0
  %331 = vmatpush2.msra.mxu0 0.0
  %332 = vmatprep.subr.mxu0 0.0
  %333 = vmatpush2.msra.mxu0 0.0
  %334 = vmatprep.subr.mxu0 0.0
  %335 = vmatpush2.msra.mxu0 0.0
  %336 = vmatprep.subr.mxu0 0.0
  %337 = vmatpush2.msra.mxu0 0.0
  %338 = vmatprep.subr.mxu0 0.0
  %339 = vmatpush2.msra.mxu0 0.0
  %340 = vmatprep.subr.mxu0 0.0
  %341 = vmatpush2.msra.mxu0 0.0
  %342 = vmatprep.mubr.f32.mxu0 0.0
  %343 = vmatmul.mubr.f32.gmra.mxu0 %v87
  %v344 = vpop.f32.mrf.mxu0
  %v345 = vadd.f32 0.0, %v344
  %v346 = vpop.f32.mrf.mxu0
  %347 = vmatprep.mubr.f32.mxu0 0.0
  %348 = vmatmul.mubr.f32.gmra.mxu0 %v90
  %v349 = vpop.f32.mrf.mxu0
  %v350 = vadd.f32 0.0, %v349
  %v351 = vpop.f32.mrf.mxu0
  %352 = vmatprep.mubr.f32.mxu0 0.0
  %353 = vmatmul.mubr.f32.gmra.mxu0 %v93
  %v354 = vpop.f32.mrf.mxu0
  %v355 = vadd.f32 0.0, %v354
  %v356 = vpop.f32.mrf.mxu0
  %357 = vmatprep.mubr.f32.mxu0 0.0
  %358 = vmatmul.mubr.f32.gmra.mxu0 %v96
  %v359 = vpop.f32.mrf.mxu0
  %v360 = vadd.f32 0.0, %v359
  %v361 = vpop.f32.mrf.mxu0
  %362 = vmatprep.mubr.f32.mxu0 0.0
  %363 = vmatmul.mubr.f32.gmra.mxu0 %v99
  %v364 = vpop.f32.mrf.mxu0
  %v365 = vadd.f32 0.0, %v364
  %v366 = vpop.f32.mrf.mxu0
  %367 = vmatprep.mubr.f32.mxu0 0.0
  %368 = vmatmul.mubr.f32.gmra.mxu0 %v102
  %v369 = vpop.f32.mrf.mxu0
  %v370 = vadd.f32 0.0, %v369
  %v371 = vpop.f32.mrf.mxu0
  %372 = vmatprep.mubr.f32.mxu0 0.0
  %373 = vmatmul.mubr.f32.gmra.mxu0 %v105
  %v374 = vpop.f32.mrf.mxu0
  %v375 = vadd.f32 0.0, %v374
  %v376 = vpop.f32.mrf.mxu0
  %377 = vmatprep.mubr.f32.mxu0 0.0
  %378 = vmatmul.mubr.f32.gmra.mxu0 %v108
  %v379 = vpop.f32.mrf.mxu0
  %v380 = vadd.f32 0.0, %v379
  %v381 = vpop.f32.mrf.mxu0
  %382 = vmatprep.mubr.f32.mxu0 0.0
  %383 = vmatmul.mubr.f32.gmra.mxu0 %v111
  %v384 = vpop.f32.mrf.mxu0
  %v385 = vadd.f32 0.0, %v384
  %v386 = vpop.f32.mrf.mxu0
  %387 = vmatprep.mubr.f32.mxu0 0.0
  %388 = vmatmul.mubr.f32.gmra.mxu0 %v114
  %v389 = vpop.f32.mrf.mxu0
  %v390 = vadd.f32 0.0, %v389
  %v391 = vpop.f32.mrf.mxu0
  %392 = vmatprep.mubr.f32.mxu0 0.0
  %393 = vmatmul.mubr.f32.gmra.mxu0 %v117
  %v394 = vpop.f32.mrf.mxu0
  %v395 = vadd.f32 0.0, %v394
  %v396 = vpop.f32.mrf.mxu0
  %397 = vmatprep.mubr.f32.mxu0 0.0
  %398 = vmatmul.mubr.f32.gmra.mxu0 %v120
  %v399 = vpop.f32.mrf.mxu0
  %v400 = vadd.f32 0.0, %v399
  %v401 = vpop.f32.mrf.mxu0
  %402 = vmatprep.mubr.f32.mxu0 0.0
  %403 = vmatmul.mubr.f32.gmra.mxu0 %v123
  %v404 = vpop.f32.mrf.mxu0
  %v405 = vadd.f32 0.0, %v404
  %v406 = vpop.f32.mrf.mxu0
  %407 = vmatprep.mubr.f32.mxu0 0.0
  %408 = vmatmul.mubr.f32.gmra.mxu0 %v126
  %v409 = vpop.f32.mrf.mxu0
  %v410 = vadd.f32 0.0, %v409
  %v411 = vpop.f32.mrf.mxu0
  %412 = vmatprep.mubr.f32.mxu0 0.0
  %413 = vmatmul.mubr.f32.gmra.mxu0 %v129
  %v414 = vpop.f32.mrf.mxu0
  %v415 = vadd.f32 0.0, %v414
  %v416 = vpop.f32.mrf.mxu0
  %417 = vmatprep.mubr.f32.mxu0 0.0
  %418 = vmatmul.mubr.f32.gmra.mxu0 %v132
  %v419 = vpop.f32.mrf.mxu0
  %v420 = vadd.f32 0.0, %v419
  %v421 = vpop.f32.mrf.mxu0
  %422 = vmatprep.mubr.f32.mxu0 0.0
  %423 = vmatmul.mubr.f32.gmra.mxu0 %v135
  %v424 = vpop.f32.mrf.mxu0
  %v425 = vadd.f32 0.0, %v424
  %v426 = vpop.f32.mrf.mxu0
  %427 = vmatprep.mubr.f32.mxu0 0.0
  %428 = vmatmul.mubr.f32.gmra.mxu0 %v138
  %v429 = vpop.f32.mrf.mxu0
  %v430 = vadd.f32 0.0, %v429
  %v431 = vpop.f32.mrf.mxu0
  %432 = vmatprep.mubr.f32.mxu0 0.0
  %433 = vmatmul.mubr.f32.gmra.mxu0 %v141
  %v434 = vpop.f32.mrf.mxu0
  %v435 = vadd.f32 0.0, %v434
  %v436 = vpop.f32.mrf.mxu0
  %437 = vmatprep.mubr.f32.mxu0 0.0
  %438 = vmatmul.mubr.f32.gmra.mxu0 %v144
  %v439 = vpop.f32.mrf.mxu0
  %v440 = vadd.f32 0.0, %v439
  %v441 = vpop.f32.mrf.mxu0
  %442 = vmatprep.mubr.f32.mxu0 0.0
  %443 = vmatmul.mubr.f32.gmra.mxu0 %v147
  %v444 = vpop.f32.mrf.mxu0
  %v445 = vadd.f32 0.0, %v444
  %v446 = vpop.f32.mrf.mxu0
  %447 = vmatprep.mubr.f32.mxu0 0.0
  %448 = vmatmul.mubr.f32.gmra.mxu0 %v150
  %v449 = vpop.f32.mrf.mxu0
  %v450 = vadd.f32 0.0, %v449
  %v451 = vpop.f32.mrf.mxu0
  %452 = vmatprep.mubr.f32.mxu0 0.0
  %453 = vmatmul.mubr.f32.gmra.mxu0 %v153
  %v454 = vpop.f32.mrf.mxu0
  %v455 = vadd.f32 0.0, %v454
  %v456 = vpop.f32.mrf.mxu0
  %457 = vmatprep.mubr.f32.mxu0 0.0
  %458 = vmatmul.mubr.f32.gmra.mxu0 %v156
  %v459 = vpop.f32.mrf.mxu0
  %v460 = vadd.f32 0.0, %v459
  %v461 = vpop.f32.mrf.mxu0
  %462 = vmatprep.mubr.f32.mxu0 0.0
  %463 = vmatmul.mubr.f32.gmra.mxu0 %v159
  %v464 = vpop.f32.mrf.mxu0
  %v465 = vadd.f32 0.0, %v464
  %v466 = vpop.f32.mrf.mxu0
  %467 = vmatprep.mubr.f32.mxu0 0.0
  %468 = vmatmul.mubr.f32.gmra.mxu0 %v162
  %v469 = vpop.f32.mrf.mxu0
  %v470 = vadd.f32 0.0, %v469
  %v471 = vpop.f32.mrf.mxu0
  %472 = vmatprep.mubr.f32.mxu0 0.0
  %473 = vmatmul.mubr.f32.gmra.mxu0 %v165
  %v474 = vpop.f32.mrf.mxu0
  %v475 = vadd.f32 0.0, %v474
  %v476 = vpop.f32.mrf.mxu0
  %477 = vmatprep.mubr.f32.mxu0 0.0
  %478 = vmatmul.mubr.f32.gmra.mxu0 %v168
  %v479 = vpop.f32.mrf.mxu0
  %v480 = vadd.f32 0.0, %v479
  %v481 = vpop.f32.mrf.mxu0
  %482 = vmatprep.mubr.f32.mxu0 0.0
  %483 = vmatmul.mubr.f32.gmra.mxu0 %v171
  %v484 = vpop.f32.mrf.mxu0
  %v485 = vadd.f32 0.0, %v484
  %v486 = vpop.f32.mrf.mxu0
  %487 = vmatprep.mubr.f32.mxu0 0.0
  %488 = vmatmul.mubr.f32.gmra.mxu0 %v174
  %v489 = vpop.f32.mrf.mxu0
  %v490 = vadd.f32 0.0, %v489
  %v491 = vpop.f32.mrf.mxu0
  %492 = vmatprep.mubr.f32.mxu0 0.0
  %493 = vmatmul.mubr.f32.gmra.mxu0 %v177
  %v494 = vpop.f32.mrf.mxu0
  %v495 = vadd.f32 0.0, %v494
  %v496 = vpop.f32.mrf.mxu0
  %497 = vmatprep.mubr.f32.mxu0 0.0
  %498 = vmatmul.mubr.f32.gmra.mxu0 %v180
  %v499 = vpop.f32.mrf.mxu0
  %v500 = vadd.f32 0.0, %v499
  %v501 = vpop.f32.mrf.mxu0
  %502 = vmatprep.mubr.f32.mxu0 0.0
  %503 = vmatmul.mubr.f32.gmra.mxu0 %v183
  %v504 = vpop.f32.mrf.mxu0
  %v505 = vadd.f32 0.0, %v504
  %v506 = vpop.f32.mrf.mxu0
  %507 = vmatprep.mubr.f32.mxu0 0.0
  %508 = vmatmul.mubr.f32.gmra.mxu0 %v186
  %v509 = vpop.f32.mrf.mxu0
  %v510 = vadd.f32 0.0, %v509
  %v511 = vpop.f32.mrf.mxu0
  %512 = vmatprep.mubr.f32.mxu0 0.0
  %513 = vmatmul.mubr.f32.gmra.mxu0 %v189
  %v514 = vpop.f32.mrf.mxu0
  %v515 = vadd.f32 0.0, %v514
  %v516 = vpop.f32.mrf.mxu0
  %517 = vmatprep.mubr.f32.mxu0 0.0
  %518 = vmatmul.mubr.f32.gmra.mxu0 %v192
  %v519 = vpop.f32.mrf.mxu0
  %v520 = vadd.f32 0.0, %v519
  %v521 = vpop.f32.mrf.mxu0
  %522 = vmatprep.mubr.f32.mxu0 0.0
  %523 = vmatmul.mubr.f32.gmra.mxu0 %v195
  %v524 = vpop.f32.mrf.mxu0
  %v525 = vadd.f32 0.0, %v524
  %v526 = vpop.f32.mrf.mxu0
  %527 = vmatprep.mubr.f32.mxu0 0.0
  %528 = vmatmul.mubr.f32.gmra.mxu0 %v198
  %v529 = vpop.f32.mrf.mxu0
  %v530 = vadd.f32 0.0, %v529
  %v531 = vpop.f32.mrf.mxu0
  %532 = vmatprep.mubr.f32.mxu0 0.0
  %533 = vmatmul.mubr.f32.gmra.mxu0 %v201
  %v534 = vpop.f32.mrf.mxu0
  %v535 = vadd.f32 0.0, %v534
  %v536 = vpop.f32.mrf.mxu0
  %537 = vmatprep.mubr.f32.mxu0 0.0
  %538 = vmatmul.mubr.f32.gmra.mxu0 %v204
  %v539 = vpop.f32.mrf.mxu0
  %v540 = vadd.f32 0.0, %v539
  %v541 = vpop.f32.mrf.mxu0
  %542 = vmatprep.mubr.f32.mxu0 0.0
  %543 = vmatmul.mubr.f32.gmra.mxu0 %v207
  %v544 = vpop.f32.mrf.mxu0
  %v545 = vadd.f32 0.0, %v544
  %v546 = vpop.f32.mrf.mxu0
  %547 = vmatprep.mubr.f32.mxu0 0.0
  %548 = vmatmul.mubr.f32.gmra.mxu0 %v210
  %v549 = vpop.f32.mrf.mxu0
  %v550 = vadd.f32 0.0, %v549
  %v551 = vpop.f32.mrf.mxu0
  %552 = vmatprep.mubr.f32.mxu0 0.0
  %553 = vmatmul.mubr.f32.gmra.mxu0 %v213
  %v554 = vpop.f32.mrf.mxu0
  %v555 = vadd.f32 0.0, %v554
  %v556 = vpop.f32.mrf.mxu0
  %557 = vmatprep.mubr.f32.mxu0 0.0
  %558 = vmatmul.mubr.f32.gmra.mxu0 %v216
  %v559 = vpop.f32.mrf.mxu0
  %v560 = vadd.f32 0.0, %v559
  %v561 = vpop.f32.mrf.mxu0
  %562 = vmatprep.mubr.f32.mxu0 0.0
  %563 = vmatmul.mubr.f32.gmra.mxu0 %v219
  %v564 = vpop.f32.mrf.mxu0
  %v565 = vadd.f32 0.0, %v564
  %v566 = vpop.f32.mrf.mxu0
  %567 = vmatprep.mubr.f32.mxu0 0.0
  %568 = vmatmul.mubr.f32.gmra.mxu0 %v222
  %v569 = vpop.f32.mrf.mxu0
  %v570 = vadd.f32 0.0, %v569
  %v571 = vpop.f32.mrf.mxu0
  %572 = vmatprep.mubr.f32.mxu0 0.0
  %573 = vmatmul.mubr.f32.gmra.mxu0 %v225
  %v574 = vpop.f32.mrf.mxu0
  %v575 = vadd.f32 0.0, %v574
  %v576 = vpop.f32.mrf.mxu0
  %577 = vmatprep.mubr.f32.mxu0 0.0
  %578 = vmatmul.mubr.f32.gmra.mxu0 %v228
  %v579 = vpop.f32.mrf.mxu0
  %v580 = vadd.f32 0.0, %v579
  %v581 = vpop.f32.mrf.mxu0
  %582 = vmatprep.mubr.f32.mxu0 0.0
  %583 = vmatmul.mubr.f32.gmra.mxu0 %v231
  %v584 = vpop.f32.mrf.mxu0
  %v585 = vadd.f32 0.0, %v584
  %v586 = vpop.f32.mrf.mxu0
  %587 = vmatprep.mubr.f32.mxu0 0.0
  %588 = vmatmul.mubr.f32.gmra.mxu0 %v234
  %v589 = vpop.f32.mrf.mxu0
  %v590 = vadd.f32 0.0, %v589
  %v591 = vpop.f32.mrf.mxu0
  %592 = vmatprep.mubr.f32.mxu0 0.0
  %593 = vmatmul.mubr.f32.gmra.mxu0 %v237
  %v594 = vpop.f32.mrf.mxu0
  %v595 = vadd.f32 0.0, %v594
  %v596 = vpop.f32.mrf.mxu0
  %597 = vmatprep.mubr.f32.mxu0 0.0
  %598 = vmatmul.mubr.f32.gmra.mxu0 %v240
  %v599 = vpop.f32.mrf.mxu0
  %v600 = vadd.f32 0.0, %v599
  %v601 = vpop.f32.mrf.mxu0
  %602 = vmatprep.mubr.f32.mxu0 0.0
  %603 = vmatmul.mubr.f32.gmra.mxu0 %v243
  %v604 = vpop.f32.mrf.mxu0
  %v605 = vadd.f32 0.0, %v604
  %v606 = vpop.f32.mrf.mxu0
  %607 = vmatprep.mubr.f32.mxu0 0.0
  %608 = vmatmul.mubr.f32.gmra.mxu0 %v246
  %v609 = vpop.f32.mrf.mxu0
  %v610 = vadd.f32 0.0, %v609
  %v611 = vpop.f32.mrf.mxu0
  %612 = vmatprep.mubr.f32.mxu0 0.0
  %613 = vmatmul.mubr.f32.gmra.mxu0 %v249
  %v614 = vpop.f32.mrf.mxu0
  %v615 = vadd.f32 0.0, %v614
  %v616 = vpop.f32.mrf.mxu0
  %617 = vmatprep.mubr.f32.mxu0 0.0
  %618 = vmatmul.mubr.f32.gmra.mxu0 %v252
  %v619 = vpop.f32.mrf.mxu0
  %v620 = vadd.f32 0.0, %v619
  %v621 = vpop.f32.mrf.mxu0
  %622 = vmatprep.mubr.f32.mxu0 0.0
  %623 = vmatmul.mubr.f32.gmra.mxu0 %v255
  %v624 = vpop.f32.mrf.mxu0
  %v625 = vadd.f32 0.0, %v624
  %v626 = vpop.f32.mrf.mxu0
  %627 = vmatprep.mubr.f32.mxu0 0.0
  %628 = vmatmul.mubr.f32.gmra.mxu0 %v258
  %v629 = vpop.f32.mrf.mxu0
  %v630 = vadd.f32 0.0, %v629
  %v631 = vpop.f32.mrf.mxu0
  %632 = vmatprep.mubr.f32.mxu0 0.0
  %633 = vmatmul.mubr.f32.gmra.mxu0 %v261
  %v634 = vpop.f32.mrf.mxu0
  %v635 = vadd.f32 0.0, %v634
  %v636 = vpop.f32.mrf.mxu0
  %637 = vmatprep.mubr.f32.mxu0 0.0
  %638 = vmatmul.mubr.f32.gmra.mxu0 %v264
  %v639 = vpop.f32.mrf.mxu0
  %v640 = vadd.f32 0.0, %v639
  %v641 = vpop.f32.mrf.mxu0
  %642 = vmatprep.mubr.f32.mxu0 0.0
  %643 = vmatmul.mubr.f32.gmra.mxu0 %v267
  %v644 = vpop.f32.mrf.mxu0
  %v645 = vadd.f32 0.0, %v644
  %v646 = vpop.f32.mrf.mxu0
  %647 = vmatprep.mubr.f32.mxu0 0.0
  %648 = vmatmul.mubr.f32.gmra.mxu0 %v270
  %v649 = vpop.f32.mrf.mxu0
  %v650 = vadd.f32 0.0, %v649
  %v651 = vpop.f32.mrf.mxu0
  %652 = vmatprep.mubr.f32.mxu0 0.0
  %653 = vmatmul.mubr.f32.gmra.mxu0 %v273
  %v654 = vpop.f32.mrf.mxu0
  %v655 = vadd.f32 0.0, %v654
  %v656 = vpop.f32.mrf.mxu0
  %657 = vmatprep.mubr.f32.mxu0 0.0
  %658 = vmatmul.mubr.f32.gmra.mxu0 %v276
  %v659 = vpop.f32.mrf.mxu0
  %v660 = vadd.f32 0.0, %v659
  %v661 = vpop.f32.mrf.mxu0
  %662 = vdwg.mxu0
  %vm663 = vcmask 130048
  %664 = vst.msk [vmem:[%s2] sm:$0xff] %vm663, %v345
  %665 = vst.msk [vmem:[%s2 + $0x8] sm:$0xff] %vm663, %v350
  %666 = vst.msk [vmem:[%s2 + $0x10] sm:$0xff] %vm663, %v355
  %667 = vst.msk [vmem:[%s2 + $0x18] sm:$0xff] %vm663, %v360
  %668 = vst.msk [vmem:[%s2 + $0x20] sm:$0xff] %vm663, %v365
  %669 = vst.msk [vmem:[%s2 + $0x28] sm:$0xff] %vm663, %v370
  %670 = vst.msk [vmem:[%s2 + $0x30] sm:$0xff] %vm663, %v375
  %671 = vst.msk [vmem:[%s2 + $0x38] sm:$0xff] %vm663, %v380
  %672 = vst.msk [vmem:[%s2 + $0x40] sm:$0xff] %vm663, %v385
  %673 = vst.msk [vmem:[%s2 + $0x48] sm:$0xff] %vm663, %v390
  %674 = vst.msk [vmem:[%s2 + $0x50] sm:$0xff] %vm663, %v395
  %675 = vst.msk [vmem:[%s2 + $0x58] sm:$0xff] %vm663, %v400
  %676 = vst.msk [vmem:[%s2 + $0x60] sm:$0xff] %vm663, %v405
  %677 = vst.msk [vmem:[%s2 + $0x68] sm:$0xff] %vm663, %v410
  %678 = vst.msk [vmem:[%s2 + $0x70] sm:$0xff] %vm663, %v415
  %679 = vst.msk [vmem:[%s2 + $0x78] sm:$0xff] %vm663, %v420
  %680 = vst.msk [vmem:[%s2 + $0x80] sm:$0xff] %vm663, %v425
  %681 = vst.msk [vmem:[%s2 + $0x88] sm:$0xff] %vm663, %v430
  %682 = vst.msk [vmem:[%s2 + $0x90] sm:$0xff] %vm663, %v435
  %683 = vst.msk [vmem:[%s2 + $0x98] sm:$0xff] %vm663, %v440
  %684 = vst.msk [vmem:[%s2 + $0xa0] sm:$0xff] %vm663, %v445
  %685 = vst.msk [vmem:[%s2 + $0xa8] sm:$0xff] %vm663, %v450
  %686 = vst.msk [vmem:[%s2 + $0xb0] sm:$0xff] %vm663, %v455
  %687 = vst.msk [vmem:[%s2 + $0xb8] sm:$0xff] %vm663, %v460
  %688 = vst.msk [vmem:[%s2 + $0xc0] sm:$0xff] %vm663, %v465
  %689 = vst.msk [vmem:[%s2 + $0xc8] sm:$0xff] %vm663, %v470
  %690 = vst.msk [vmem:[%s2 + $0xd0] sm:$0xff] %vm663, %v475
  %691 = vst.msk [vmem:[%s2 + $0xd8] sm:$0xff] %vm663, %v480
  %692 = vst.msk [vmem:[%s2 + $0xe0] sm:$0xff] %vm663, %v485
  %693 = vst.msk [vmem:[%s2 + $0xe8] sm:$0xff] %vm663, %v490
  %694 = vst.msk [vmem:[%s2 + $0xf0] sm:$0xff] %vm663, %v495
  %695 = vst.msk [vmem:[%s2 + $0xf8] sm:$0xff] %vm663, %v500
  %696 = vst.msk [vmem:[%s2 + $0x100] sm:$0xff] %vm663, %v505
  %697 = vst.msk [vmem:[%s2 + $0x108] sm:$0xff] %vm663, %v510
  %698 = vst.msk [vmem:[%s2 + $0x110] sm:$0xff] %vm663, %v515
  %699 = vst.msk [vmem:[%s2 + $0x118] sm:$0xff] %vm663, %v520
  %700 = vst.msk [vmem:[%s2 + $0x120] sm:$0xff] %vm663, %v525
  %701 = vst.msk [vmem:[%s2 + $0x128] sm:$0xff] %vm663, %v530
  %702 = vst.msk [vmem:[%s2 + $0x130] sm:$0xff] %vm663, %v535
  %703 = vst.msk [vmem:[%s2 + $0x138] sm:$0xff] %vm663, %v540
  %704 = vst.msk [vmem:[%s2 + $0x140] sm:$0xff] %vm663, %v545
  %705 = vst.msk [vmem:[%s2 + $0x148] sm:$0xff] %vm663, %v550
  %706 = vst.msk [vmem:[%s2 + $0x150] sm:$0xff] %vm663, %v555
  %707 = vst.msk [vmem:[%s2 + $0x158] sm:$0xff] %vm663, %v560
  %708 = vst.msk [vmem:[%s2 + $0x160] sm:$0xff] %vm663, %v565
  %709 = vst.msk [vmem:[%s2 + $0x168] sm:$0xff] %vm663, %v570
  %710 = vst.msk [vmem:[%s2 + $0x170] sm:$0xff] %vm663, %v575
  %711 = vst.msk [vmem:[%s2 + $0x178] sm:$0xff] %vm663, %v580
  %712 = vst.msk [vmem:[%s2 + $0x180] sm:$0xff] %vm663, %v585
  %713 = vst.msk [vmem:[%s2 + $0x188] sm:$0xff] %vm663, %v590
  %714 = vst.msk [vmem:[%s2 + $0x190] sm:$0xff] %vm663, %v595
  %715 = vst.msk [vmem:[%s2 + $0x198] sm:$0xff] %vm663, %v600
  %716 = vst.msk [vmem:[%s2 + $0x1a0] sm:$0xff] %vm663, %v605
  %717 = vst.msk [vmem:[%s2 + $0x1a8] sm:$0xff] %vm663, %v610
  %718 = vst.msk [vmem:[%s2 + $0x1b0] sm:$0xff] %vm663, %v615
  %719 = vst.msk [vmem:[%s2 + $0x1b8] sm:$0xff] %vm663, %v620
  %720 = vst.msk [vmem:[%s2 + $0x1c0] sm:$0xff] %vm663, %v625
  %721 = vst.msk [vmem:[%s2 + $0x1c8] sm:$0xff] %vm663, %v630
  %722 = vst.msk [vmem:[%s2 + $0x1d0] sm:$0xff] %vm663, %v635
  %723 = vst.msk [vmem:[%s2 + $0x1d8] sm:$0xff] %vm663, %v640
  %724 = vst.msk [vmem:[%s2 + $0x1e0] sm:$0xff] %vm663, %v645
  %725 = vst.msk [vmem:[%s2 + $0x1e8] sm:$0xff] %vm663, %v650
  %726 = vst.msk [vmem:[%s2 + $0x1f0] sm:$0xff] %vm663, %v655
  %727 = vst.msk [vmem:[%s2 + $0x1f8] sm:$0xff] %vm663, %v660
  // Predicated region
  $region10: #{tpu_custom_call.1} parent=0 // pred_check
    _
  $region11: #{tpu_custom_call.1} parent=0 // pred_check_branch
    %729 = sbr.rel (0) target = $region13
  $region12: #{tpu_custom_call.1} parent=0 // pred_region
    _
  $region13: #{tpu_custom_call.1} parent=0 // pred_fallthru
    _
  // Predicated region
  $region14: #{tpu_custom_call.1} parent=0 // pred_check
    _
  $region15: #{tpu_custom_call.1} parent=0 // pred_check_branch
    %731 = sbr.rel (0) target = $region17
  $region16: #{tpu_custom_call.1} parent=0 // pred_region
    _
  $region17: #{tpu_custom_call.1} parent=0 // pred_fallthru
    _

</llo_original>
